<compile_context>
chip_gen: v7x
topology: tpu7x:2x2x1
jax: 0.10.0
libtpu: 0.0.40
codegen_flags: <defaults>
</compile_context>

<pallas_src>
import jax
import jax.numpy as jnp
from jax.experimental import pallas as pl
from jax.experimental.pallas import tpu as pltpu


def _encoder_kernel(x_ref, w_ref, b_ref, o_ref):
    # x_ref: (S, TB, D) f32   -- original (S, B, D) layout, batch-blocked
    # w_ref: (D, 3*Lp) bf16   -- conv taps concatenated along the lane dim
    # b_ref: (1, Lp)   f32
    # o_ref: (TB, Lp)  src.dtype
    S, TB, D = x_ref.shape
    Lp = b_ref.shape[1]
    S_out = S - 2  # kernel_size=3, stride=1, no padding

    # One big, aligned MXU matmul: M = S*TB, K = D, N = 3*Lp (f32 accumulation).
    x = x_ref[...].astype(jnp.bfloat16).reshape(S * TB, D)
    y = jnp.dot(x, w_ref[...], preferred_element_type=jnp.float32)
    y = y.reshape(S, TB, 3 * Lp)

    # Conv1d(kernel=3) == shifted add of the 3 taps; shift along time axis only.
    conv = (
        y[0:S_out, :, 0 * Lp:1 * Lp]
        + y[1:S_out + 1, :, 1 * Lp:2 * Lp]
        + y[2:S_out + 2, :, 2 * Lp:3 * Lp]
    )  # (S_out, TB, Lp) f32

    # Max over time first, then bias + ReLU (ReLU monotone, bias per-channel).
    m = jnp.max(conv, axis=0)                                    # (TB, Lp)
    o_ref[...] = jnp.maximum(m + b_ref[...], 0.0).astype(o_ref.dtype)


def cnn_latent_encoder_pallas(src, weight, bias, *, tb_max=64):
    """src: (S, B, d_model); weight: (d_latent, d_model, 3) [PyTorch Conv1d layout];
    bias: (d_latent,).  Returns (B, d_latent)."""
    S, B, D = src.shape
    L = weight.shape[0]
    assert S >= 3, "Conv1d(kernel=3, no padding) requires S >= 3"

    # Lane-dense latent dim (multiple of 128).
    Lp = pl.cdiv(L, 128) * 128

    # Batch block; pad B only if it does not divide evenly.
    TB = min(B, tb_max)
    Bp = pl.cdiv(B, TB) * TB
    x = src if Bp == B else jnp.pad(src, ((0, 0), (0, Bp - B), (0, 0)))

    # Weights: (L, D, 3) -> (D, 3*Lp) bf16 with taps concatenated along lanes:
    #   w_cat[d, k*Lp + l] = weight[l, d, k]
    w = jnp.transpose(weight, (2, 1, 0))                         # (3, D, L)
    if Lp != L:
        w = jnp.pad(w, ((0, 0), (0, 0), (0, Lp - L)))
    w_cat = jnp.transpose(w, (1, 0, 2)).reshape(D, 3 * Lp).astype(jnp.bfloat16)

    b = bias if Lp == L else jnp.pad(bias, (0, Lp - L))
    b = b.reshape(1, Lp).astype(jnp.float32)

    out = pl.pallas_call(
        _encoder_kernel,
        out_shape=jax.ShapeDtypeStruct((Bp, Lp), src.dtype),
        grid_spec=pltpu.PrefetchScalarGridSpec(
            num_scalar_prefetch=0,
            grid=(Bp // TB,),
            in_specs=[
                # Tile the original (S, B, D) layout directly -- no XLA transpose.
                pl.BlockSpec((S, TB, D), lambda i: (0, i, 0)),
                # Constant index_map -> weights/bias fetched once, kept resident.
                pl.BlockSpec((D, 3 * Lp), lambda i: (0, 0)),
                pl.BlockSpec((1, Lp), lambda i: (0, 0)),
            ],
            out_specs=pl.BlockSpec((TB, Lp), lambda i: (i, 0)),
        ),
        compiler_params=pltpu.CompilerParams(
            dimension_semantics=("parallel",),
        ),
    )(x, w_cat, b)

    return out[:B, :L]


def _reference(src, weight, bias):
    # Pure-JAX f32 reference mirroring the PyTorch module.
    x = jnp.transpose(src, (1, 2, 0))                 # (B, D, S)
    S = x.shape[-1]
    S_out = S - 2
    y = jnp.zeros((x.shape[0], weight.shape[0], S_out), jnp.float32)
    for k in range(3):
        # (B, D, S_out) x (L, D) -> (B, L, S_out)
        y = y + jnp.einsum("bds,ld->bls", x[:, :, k:k + S_out], weight[:, :, k])
    y = y + bias[None, :, None]
    y = jnp.maximum(y, 0.0)
    return jnp.max(y, axis=2).astype(src.dtype)


if __name__ == "__main__":
    d_model = 32
    d_latent = 16
    S = 8
    B = 2

    key = jax.random.PRNGKey(0)
    k1, k2, k3 = jax.random.split(key, 3)

    src = jax.random.normal(k1, (S, B, d_model), dtype=jnp.float32)
    # PyTorch Conv1d layout: (out_channels, in_channels, kernel_size).
    weight = 0.1 * jax.random.normal(k2, (d_latent, d_model, 3), dtype=jnp.float32)
    bias = 0.1 * jax.random.normal(k3, (d_latent,), dtype=jnp.float32)

    out = cnn_latent_encoder_pallas(src, weight, bias)
    out = jax.block_until_ready(out)

    ref = _reference(src, weight, bias)
    assert out.shape == (B, d_latent), out.shape
    # bf16 MXU inputs with f32 accumulation -> relaxed tolerance vs f32 reference.
    assert jnp.allclose(out, ref, atol=2e-2, rtol=2e-2), (out, ref)

    print("KERNEL_OK")
</pallas_src>

<mosaic_0001>
module attributes {stable_mosaic.version = 11 : i64} {
  func.func @_encoder_kernel(%arg0: i32, %arg1: memref<8x2x32xf32, #tpu.memory_space<vmem>>, %arg2: memref<32x384xbf16, #tpu.memory_space<vmem>>, %arg3: memref<1x128xf32, #tpu.memory_space<vmem>>, %arg4: memref<2x128xf32, #tpu.memory_space<vmem>>) attributes {dimension_semantics = [#tpu.dimension_semantics<parallel>], iteration_bounds = array<i64: 1>, scalar_prefetch = 0 : i64, scratch_operands = 0 : i64, tpu.core_type = #tpu.core_type<tc>, window_params = [{transform_indices = @transform_0, window_bounds = array<i64: 8, 2, 32>}, {pipeline_mode = #tpu.pipeline_mode<synchronous>, transform_indices = @transform_1, window_bounds = array<i64: 32, 384>}, {pipeline_mode = #tpu.pipeline_mode<synchronous>, transform_indices = @transform_2, window_bounds = array<i64: 1, 128>}, {transform_indices = @transform_3, window_bounds = array<i64: 2, 128>}]} {
    %c0 = arith.constant 0 : index
    %c0_0 = arith.constant 0 : index
    %c0_1 = arith.constant 0 : index
    %0 = vector.load %arg1[%c0, %c0_0, %c0_1] : memref<8x2x32xf32, #tpu.memory_space<vmem>>, vector<8x2x32xf32>
    %1 = arith.truncf %0 : vector<8x2x32xf32> to vector<8x2x32xbf16>
    %2 = vector.shape_cast %1 : vector<8x2x32xbf16> to vector<16x32xbf16>
    %c0_2 = arith.constant 0 : index
    %c0_3 = arith.constant 0 : index
    %3 = vector.load %arg2[%c0_2, %c0_3] : memref<32x384xbf16, #tpu.memory_space<vmem>>, vector<32x384xbf16>
    %cst = arith.constant dense<0.000000e+00> : vector<16x384xf32>
    %4 = tpu.matmul %2, %3, %cst {dimension_numbers = #tpu.dot_dimension_numbers<[1], [0], [0], [1], [0, 0, 1, 1], [], []>} : vector<16x32xbf16>, vector<32x384xbf16>, vector<16x384xf32> -> vector<16x384xf32>
    %5 = vector.shape_cast %4 : vector<16x384xf32> to vector<8x2x384xf32>
    %6 = vector.extract_strided_slice %5 {offsets = [0, 0, 0], sizes = [6, 2, 128], strides = [1, 1, 1]} : vector<8x2x384xf32> to vector<6x2x128xf32>
    %7 = vector.extract_strided_slice %5 {offsets = [1, 0, 128], sizes = [6, 2, 128], strides = [1, 1, 1]} : vector<8x2x384xf32> to vector<6x2x128xf32>
    %8 = arith.addf %6, %7 : vector<6x2x128xf32>
    %9 = vector.extract_strided_slice %5 {offsets = [2, 0, 256], sizes = [6, 2, 128], strides = [1, 1, 1]} : vector<8x2x384xf32> to vector<6x2x128xf32>
    %10 = arith.addf %8, %9 : vector<6x2x128xf32>
    %cst_4 = arith.constant dense<0xFF800000> : vector<2x128xf32>
    %11 = vector.multi_reduction <maximumf>, %10, %cst_4 [0] : vector<6x2x128xf32> to vector<2x128xf32>
    %c0_5 = arith.constant 0 : index
    %c0_6 = arith.constant 0 : index
    %12 = vector.load %arg3[%c0_5, %c0_6] : memref<1x128xf32, #tpu.memory_space<vmem>>, vector<1x128xf32>
    %13 = vector.broadcast %12 : vector<1x128xf32> to vector<2x128xf32>
    %14 = arith.addf %11, %13 : vector<2x128xf32>
    %cst_7 = arith.constant 0.000000e+00 : f32
    %15 = vector.broadcast %cst_7 : f32 to vector<2x128xf32>
    %16 = arith.maximumf %14, %15 : vector<2x128xf32>
    %c0_8 = arith.constant 0 : index
    %c0_9 = arith.constant 0 : index
    %17 = vector.load %arg4[%c0_8, %c0_9] : memref<2x128xf32, #tpu.memory_space<vmem>>, vector<2x128xf32>
    tpu.vector_store %arg4[%c0_8, %c0_9], %16 {strides = array<i32>} : memref<2x128xf32, #tpu.memory_space<vmem>>, vector<2x128xf32>,
    return
  }
  func.func @transform_0(%arg0: i32) -> (i32, i32, i32) {
    %c0_i32 = arith.constant 0 : i32
    %c0_i32_0 = arith.constant 0 : i32
    %c0_i32_1 = arith.constant 0 : i32
    return %c0_i32, %arg0, %c0_i32_0 : i32, i32, i32
  }
  func.func @transform_1(%arg0: i32) -> (i32, i32) {
    %c0_i32 = arith.constant 0 : i32
    %c0_i32_0 = arith.constant 0 : i32
    %c0_i32_1 = arith.constant 0 : i32
    return %c0_i32, %c0_i32_0 : i32, i32
  }
  func.func @transform_2(%arg0: i32) -> (i32, i32) {
    %c0_i32 = arith.constant 0 : i32
    %c0_i32_0 = arith.constant 0 : i32
    %c0_i32_1 = arith.constant 0 : i32
    return %c0_i32, %c0_i32_0 : i32, i32
  }
  func.func @transform_3(%arg0: i32) -> (i32, i32) {
    %c0_i32 = arith.constant 0 : i32
    %c0_i32_0 = arith.constant 0 : i32
    return %arg0, %c0_i32 : i32, i32
  }
}

</mosaic_0001>

<llo_original>
// kernel: tpu_custom_call.1
$region0: #{tpu_custom_call.1}
  #allocation0 [shape = 'u32[]', space=smem, size = 0x4, offset = 0x4, fixed_abs, tag = 'smem constant byte address 0x4 - core index']
  #allocation1 [shape = 'u32[144,128]{1,0:T(1,128)}', space=vmem, size = 0x12000, scoped, tag = 'internal scratch']
  %s0 = inlined_call_operand.hbm [shape: f32[8,2,32], index: 0, kind: input, shape index: {}]
  %s1 = inlined_call_operand.hbm [shape: bf16[32,384], index: 1, kind: input, shape index: {}]
  %s2 = inlined_call_operand.vmem [shape: f32[1,128], index: 2, kind: input, shape index: {}]
  %s3 = inlined_call_operand.hbm [shape: f32[2,128], index: 3, kind: output, shape index: {}]
  %s4 = sld [smem:[#allocation0]]
  $region30: #{tpu_custom_call.1} parent=0
    _
  %s6 = ssub.s32 1, %s4
  %s7 = scalar_select 0, %s6, %s4
  $region1: #{tpu_custom_call.1} parent=0
    #allocation2 [shape = 'u8[8192]{0}', space=vmem, size = 0x2000, scoped, tag = 'input window, operand 0, single buffered']
    #allocation3 [shape = 's32[1]{0}', space=sflag, size = 0x4, scoped, tag = 'scoped memory for tpu_custom_call.1']
    #allocation4 [shape = 's32[1]{0}', space=sflag, size = 0x4, scoped, tag = 'scoped memory for tpu_custom_call.1']
    #allocation5 [shape = 'u8[24576]{0}', space=vmem, size = 0x6000, scoped, tag = 'input window, operand 1, single buffered']
    #allocation6 [shape = 's32[1]{0}', space=sflag, size = 0x4, scoped, tag = 'scoped memory for tpu_custom_call.1']
    #allocation7 [shape = 'u8[1024]{0}', space=vmem, size = 0x400, scoped, tag = 'output window, operand 0, single buffered']
    %8 = vsyncpa [#allocation3], 0
    %9 = vsyncpa [#allocation6], 0
    %10 = vsyncpa [#allocation4], 0
    // Predicated region
    $region2: #{tpu_custom_call.1} parent=1 // pred_check
      _
    $region3: #{tpu_custom_call.1} parent=1 // pred_check_branch
      %12 = sbr.rel (0) target = $region5
    $region4: #{tpu_custom_call.1} parent=1 // pred_region
      %s14 = ssub.s32 256, 256
      %15 = vsyncadd [#allocation3], %s14
      %s16 = sshll.u32 [#allocation2], 4
      %s17 = int_to_ptr.vmem [resolvable:$true] %s16
      %22 = dma.hbm_to_vmem [thread:$0]  %s0, 256, %s17, [#allocation3], 32, 32, 2
    $region5: #{tpu_custom_call.1} parent=1 // pred_fallthru
      _
    // Predicated region
    $region6: #{tpu_custom_call.1} parent=1 // pred_check
      _
    $region7: #{tpu_custom_call.1} parent=1 // pred_check_branch
      %24 = sbr.rel (0) target = $region9
    $region8: #{tpu_custom_call.1} parent=1 // pred_region
      %s26 = ssub.s32 768, 768
      %27 = vsyncadd [#allocation6], %s26
      %s28 = sshll.u32 [#allocation5], 4
      %s29 = int_to_ptr.vmem [resolvable:$true] %s28
      %34 = dma.hbm_to_vmem [thread:$0]  %s1, 768, %s29, [#allocation6], 192, 192, 12
    $region9: #{tpu_custom_call.1} parent=1 // pred_fallthru
      _
    // Predicated region
    $region10: #{tpu_custom_call.1} parent=1 // pred_check
      _
    $region11: #{tpu_custom_call.1} parent=1 // pred_check_branch
      %36 = sbr.rel (0) target = $region13
    $region12: #{tpu_custom_call.1} parent=1 // pred_region
      _
    $region13: #{tpu_custom_call.1} parent=1 // pred_fallthru
      _
    // Predicated region
    $region14: #{tpu_custom_call.1} parent=1 // pred_check
      _
    $region15: #{tpu_custom_call.1} parent=1 // pred_check_branch
      %38 = sbr.rel (0) target = $region17
    $region16: #{tpu_custom_call.1} parent=1 // pred_region
      %39 = dma.done [#allocation3], 256
    $region17: #{tpu_custom_call.1} parent=1 // pred_fallthru
      _
    // Predicated region
    $region18: #{tpu_custom_call.1} parent=1 // pred_check
      _
    $region19: #{tpu_custom_call.1} parent=1 // pred_check_branch
      %41 = sbr.rel (0) target = $region21
    $region20: #{tpu_custom_call.1} parent=1 // pred_region
      %42 = dma.done [#allocation6], 768
    $region21: #{tpu_custom_call.1} parent=1 // pred_fallthru
      _
    %v44 = vld [vmem:[#allocation2] sm:$0x3]
    %v45 = vld [vmem:[#allocation2 + $0x2] sm:$0x3]
    %v46 = vld [vmem:[#allocation2 + $0x4] sm:$0x3]
    %v47 = vld [vmem:[#allocation2 + $0x6] sm:$0x3]
    %v48 = vld [vmem:[#allocation2 + $0x8] sm:$0x3]
    %v49 = vld [vmem:[#allocation2 + $0xa] sm:$0x3]
    %v50 = vld [vmem:[#allocation2 + $0xc] sm:$0x3]
    %v51 = vld [vmem:[#allocation2 + $0xe] sm:$0x3]
    %v52 = vpack.c.bf16 %v44, %v44
    %v53 = vpack.c.bf16 %v45, %v45
    %v54 = vpack.c.bf16 %v46, %v46
    %v55 = vpack.c.bf16 %v47, %v47
    %v56 = vpack.c.bf16 %v48, %v48
    %v57 = vpack.c.bf16 %v49, %v49
    %v58 = vpack.c.bf16 %v50, %v50
    %v59 = vpack.c.bf16 %v51, %v51
    %v60 = vld [vmem:[#allocation5] sm:$0xff]
    %v61 = vld [vmem:[#allocation5 + $0x8] sm:$0xf]
    %v62 = vld [vmem:[#allocation5 + $0xc] sm:$0xff]
    %v63 = vld [vmem:[#allocation5 + $0x14] sm:$0xf]
    %v64 = vld [vmem:[#allocation5 + $0x18] sm:$0xff]
    %v65 = vld [vmem:[#allocation5 + $0x20] sm:$0xf]
    %v66 = vld [vmem:[#allocation5 + $0x24] sm:$0xff]
    %v67 = vld [vmem:[#allocation5 + $0x2c] sm:$0xf]
    %v76 = vcombine.low %v52, %v53
    %v77 = vcombine.low %v54, %v55
    %v78 = vcombine.low %v56, %v57
    %v79 = vcombine.low %v58, %v59
    %v81 = vunpack.c.l.s4 1966171168
    %v82 = vunpack.c.0.s8 %v81
    %v83 = vlaneseq
    %v84 = vshrl.u32 %v83, 7
    %v85 = vsub.s32 %v82, %v84
    %v86 = vrot.slane %v76, %v85
    %v88 = vunpack.c.l.s4 1966171168
    %v89 = vunpack.c.0.s8 %v88
    %v90 = vlaneseq
    %v91 = vshrl.u32 %v90, 7
    %v92 = vsub.s32 %v89, %v91
    %v93 = vrot.slane %v77, %v92
    %v95 = vunpack.c.l.s4 1966171168
    %v96 = vunpack.c.0.s8 %v95
    %v97 = vlaneseq
    %v98 = vshrl.u32 %v97, 7
    %v99 = vsub.s32 %v96, %v98
    %v100 = vrot.slane %v78, %v99
    %v102 = vunpack.c.l.s4 1966171168
    %v103 = vunpack.c.0.s8 %v102
    %v104 = vlaneseq
    %v105 = vshrl.u32 %v104, 7
    %v106 = vsub.s32 %v103, %v105
    %v107 = vrot.slane %v79, %v106
    %v108 = vcombine.low %v86, %v93
    %v109 = vcombine.low %v100, %v107
    %v111 = vunpack.c.l.s4 1966171168
    %v112 = vunpack.c.0.s8 %v111
    %v113 = vlaneseq
    %v114 = vshrl.u32 %v113, 7
    %v115 = vsub.s32 %v112, %v114
    %v116 = vrot.slane %v108, %v115
    %v118 = vunpack.c.l.s4 1966171168
    %v119 = vunpack.c.0.s8 %v118
    %v120 = vlaneseq
    %v121 = vshrl.u32 %v120, 7
    %v122 = vsub.s32 %v119, %v121
    %v123 = vrot.slane %v109, %v122
    %v124 = vcombine.low %v116, %v123
    %v133 = vunpack.c.l.b16 %v60
    %v134 = vunpack.c.h.b16 %v60
    %v135 = vunpack.c.l.b16 %v61
    %v136 = vunpack.c.l.b16 %v62
    %v137 = vunpack.c.h.b16 %v62
    %v138 = vunpack.c.l.b16 %v63
    %v139 = vunpack.c.l.b16 %v64
    %v140 = vunpack.c.h.b16 %v64
    %v141 = vunpack.c.l.b16 %v65
    %v142 = vunpack.c.l.b16 %v66
    %v143 = vunpack.c.h.b16 %v66
    %v144 = vunpack.c.l.b16 %v67
    %v145 = vpack.c.b16 %v136, %v133
    %v146 = vpack.c.b16 %v137, %v134
    %v147 = vpack.c.b16 %v138, %v135
    %v148 = vpack.c.b16 %v142, %v139
    %v149 = vpack.c.b16 %v143, %v140
    %v150 = vpack.c.b16 %v144, %v141
    %vm157 = vcmask 261120
    %v159 = vsel %vm157, %v124, 0
    %161 = vmatprep.subr.bf16.mxu0 %v146
    %162 = vmatpush1.bf16.msra.mxu0 %v145
    %163 = vmatprep.subr.bf16.mxu0 %v149
    %164 = vmatpush1.bf16.msra.mxu0 %v148
    %165 = vmatprep.subr.bf16.mxu0 0
    %166 = vmatpush1.bf16.msra.mxu0 0
    %167 = vmatprep.subr.bf16.mxu0 0
    %168 = vmatpush1.bf16.msra.mxu0 0
    %169 = vmatprep.subr.bf16.mxu0 0
    %170 = vmatpush1.bf16.msra.mxu0 0
    %171 = vmatprep.subr.bf16.mxu0 0
    %172 = vmatpush1.bf16.msra.mxu0 0
    %173 = vmatprep.subr.bf16.mxu0 0
    %174 = vmatpush1.bf16.msra.mxu0 0
    %175 = vmatprep.subr.bf16.mxu0 0
    %176 = vmatpush1.bf16.msra.mxu0 0
    %177 = vmatprep.subr.bf16.mxu0 0
    %178 = vmatpush1.bf16.msra.mxu0 0
    %179 = vmatprep.subr.bf16.mxu0 0
    %180 = vmatpush1.bf16.msra.mxu0 0
    %181 = vmatprep.subr.bf16.mxu0 0
    %182 = vmatpush1.bf16.msra.mxu0 0
    %183 = vmatprep.subr.bf16.mxu0 0
    %184 = vmatpush1.bf16.msra.mxu0 0
    %185 = vmatprep.subr.bf16.mxu0 0
    %186 = vmatpush1.bf16.msra.mxu0 0
    %187 = vmatprep.subr.bf16.mxu0 0
    %188 = vmatpush1.bf16.msra.mxu0 0
    %189 = vmatprep.subr.bf16.mxu0 0
    %190 = vmatpush1.bf16.msra.mxu0 0
    %191 = vmatprep.subr.bf16.mxu0 0
    %192 = vmatpush1.bf16.msra.mxu0 0
    %193 = vmatprep.mubr.bf16.mxu0 0
    %194 = vmatmul.mubr.bf16.gmra.mrb[0].mxu0 %v159
    %v195 = vpop.f32.mrb[0].mxu0
    %v196 = vadd.f32 0.0, %v195
    %v197 = vpop.f32.mrb[0].mxu0
    %v198 = vadd.f32 0.0, %v197
    %v199 = vpop.f32.mrb[0].mxu0
    %v200 = vadd.f32 0.0, %v199
    %v201 = vpop.f32.mrb[0].mxu0
    %v202 = vadd.f32 0.0, %v201
    %203 = vdwg.mxu0
    %204 = vmatprep.subr.bf16.mxu0 0
    %205 = vmatpush1.bf16.msra.mxu0 %v147
    %206 = vmatprep.subr.bf16.mxu0 0
    %207 = vmatpush1.bf16.msra.mxu0 %v150
    %208 = vmatprep.subr.bf16.mxu0 0
    %209 = vmatpush1.bf16.msra.mxu0 0
    %210 = vmatprep.subr.bf16.mxu0 0
    %211 = vmatpush1.bf16.msra.mxu0 0
    %212 = vmatprep.subr.bf16.mxu0 0
    %213 = vmatpush1.bf16.msra.mxu0 0
    %214 = vmatprep.subr.bf16.mxu0 0
    %215 = vmatpush1.bf16.msra.mxu0 0
    %216 = vmatprep.subr.bf16.mxu0 0
    %217 = vmatpush1.bf16.msra.mxu0 0
    %218 = vmatprep.subr.bf16.mxu0 0
    %219 = vmatpush1.bf16.msra.mxu0 0
    %220 = vmatprep.subr.bf16.mxu0 0
    %221 = vmatpush1.bf16.msra.mxu0 0
    %222 = vmatprep.subr.bf16.mxu0 0
    %223 = vmatpush1.bf16.msra.mxu0 0
    %224 = vmatprep.subr.bf16.mxu0 0
    %225 = vmatpush1.bf16.msra.mxu0 0
    %226 = vmatprep.subr.bf16.mxu0 0
    %227 = vmatpush1.bf16.msra.mxu0 0
    %228 = vmatprep.subr.bf16.mxu0 0
    %229 = vmatpush1.bf16.msra.mxu0 0
    %230 = vmatprep.subr.bf16.mxu0 0
    %231 = vmatpush1.bf16.msra.mxu0 0
    %232 = vmatprep.subr.bf16.mxu0 0
    %233 = vmatpush1.bf16.msra.mxu0 0
    %234 = vmatprep.subr.bf16.mxu0 0
    %235 = vmatpush1.bf16.msra.mxu0 0
    %236 = vmatprep.mubr.bf16.mxu0 0
    %237 = vmatmul.mubr.bf16.gmra.mrb[0].mxu0 %v159
    %v238 = vpop.f32.mrb[0].mxu0
    %v239 = vadd.f32 0.0, %v238
    %v240 = vpop.f32.mrb[0].mxu0
    %v241 = vpop.f32.mrb[0].mxu0
    %v242 = vadd.f32 0.0, %v241
    %v243 = vpop.f32.mrb[0].mxu0
    %244 = vdwg.mxu0
    %v251 = vcombine.low %v196, %v198
    %v252 = vcombine.high %v196, %v198
    %v253 = vcombine.high %v239, %v239
    %v255 = vunpack.c.l.s4 1983009808
    %v256 = vunpack.c.0.s8 %v255
    %v257 = vlaneseq
    %v258 = vshrl.u32 %v257, 7
    %v259 = vsub.s32 %v256, %v258
    %v260 = vrot.slane %v251, %v259
    %v262 = vunpack.c.l.s4 1983009808
    %v263 = vunpack.c.0.s8 %v262
    %v264 = vlaneseq
    %v265 = vshrl.u32 %v264, 7
    %v266 = vsub.s32 %v263, %v265
    %v267 = vrot.slane %v252, %v266
    %v269 = vunpack.c.l.s4 1983009808
    %v270 = vunpack.c.0.s8 %v269
    %v271 = vlaneseq
    %v272 = vshrl.u32 %v271, 7
    %v273 = vsub.s32 %v270, %v272
    %v274 = vrot.slane %v239, %v273
    %v276 = vunpack.c.l.s4 1983009808
    %v277 = vunpack.c.0.s8 %v276
    %v278 = vlaneseq
    %v279 = vshrl.u32 %v278, 7
    %v280 = vsub.s32 %v277, %v279
    %v281 = vrot.slane %v253, %v280
    %v282 = vcombine.low %v260, %v274
    %v283 = vcombine.high %v260, %v274
    %v284 = vcombine.low %v267, %v281
    %v285 = vcombine.high %v267, %v281
    %v286 = vcombine.low %v200, %v202
    %v287 = vcombine.high %v200, %v202
    %v288 = vcombine.high %v242, %v242
    %v290 = vunpack.c.l.s4 1983009808
    %v291 = vunpack.c.0.s8 %v290
    %v292 = vlaneseq
    %v293 = vshrl.u32 %v292, 7
    %v294 = vsub.s32 %v291, %v293
    %v295 = vrot.slane %v286, %v294
    %v297 = vunpack.c.l.s4 1983009808
    %v298 = vunpack.c.0.s8 %v297
    %v299 = vlaneseq
    %v300 = vshrl.u32 %v299, 7
    %v301 = vsub.s32 %v298, %v300
    %v302 = vrot.slane %v287, %v301
    %v304 = vunpack.c.l.s4 1983009808
    %v305 = vunpack.c.0.s8 %v304
    %v306 = vlaneseq
    %v307 = vshrl.u32 %v306, 7
    %v308 = vsub.s32 %v305, %v307
    %v309 = vrot.slane %v242, %v308
    %v311 = vunpack.c.l.s4 1983009808
    %v312 = vunpack.c.0.s8 %v311
    %v313 = vlaneseq
    %v314 = vshrl.u32 %v313, 7
    %v315 = vsub.s32 %v312, %v314
    %v316 = vrot.slane %v288, %v315
    %v317 = vcombine.low %v295, %v309
    %v318 = vcombine.high %v295, %v309
    %v319 = vcombine.low %v302, %v316
    %v320 = vcombine.high %v302, %v316
    %v327 = vrot.slane %v283, 2
    %v328 = vrot.slane %v284, 2
    %v329 = vrot.slane %v285, 2
    %v330 = vrot.slane %v317, 2
    %v331 = vrot.slane %v318, 2
    %v332 = vrot.slane %v319, 2
    %v339 = vadd.f32 %v282, %v327
    %v340 = vadd.f32 %v283, %v328
    %v341 = vadd.f32 %v284, %v329
    %v342 = vadd.f32 %v285, %v330
    %v343 = vadd.f32 %v317, %v331
    %v344 = vadd.f32 %v318, %v332
    %v345 = vrot.slane %v284, 4
    %v346 = vrot.slane %v285, 4
    %v347 = vrot.slane %v317, 4
    %v348 = vrot.slane %v318, 4
    %v349 = vrot.slane %v319, 4
    %v350 = vrot.slane %v320, 4
    %v357 = vadd.f32 %v339, %v345
    %v358 = vadd.f32 %v340, %v346
    %v359 = vadd.f32 %v341, %v347
    %v360 = vadd.f32 %v342, %v348
    %v361 = vadd.f32 %v343, %v349
    %v362 = vadd.f32 %v344, %v350
    %vm363 = vcmask 1041408
    %v364 = vsel %vm363, %v357, -inf
    %v365 = vsel %vm363, %v358, -inf
    %v366 = vsel %vm363, %v359, -inf
    %v367 = vsel %vm363, %v360, -inf
    %v368 = vsel %vm363, %v361, -inf
    %v369 = vmax.f32 %v364, %v368
    %v370 = vsel %vm363, %v362, -inf
    %v371 = vmax.f32 %v365, %v370
    %v372 = vmax.f32 %v369, %v371
    %v373 = vmax.f32 %v366, %v367
    %v374 = vmax.f32 %v372, %v373
    %v375 = vld [vmem:[%s2] sm:$0x1]
    %v377 = vlaneseq
    %v378 = vshrl.u32 %v377, 7
    %v379 = vsub.s32 0, %v378
    %v380 = vrot.slane %v375, %v379
    %v382 = vadd.f32 %v374, %v380
    %v383 = vmax.f32 %v382, 0.0
    %384 = vst [vmem:[#allocation7] sm:$0x3] %v383
    // Predicated region
    $region22: #{tpu_custom_call.1} parent=1 // pred_check
      _
    $region23: #{tpu_custom_call.1} parent=1 // pred_check_branch
      %386 = sbr.rel (0) target = $region25
    $region24: #{tpu_custom_call.1} parent=1 // pred_region
      %s388 = ssub.s32 32, 32
      %389 = vsyncadd [#allocation4], %s388
      %s391 = sshll.u32 [#allocation7], 4
      %s392 = int_to_ptr.vmem [resolvable:$true] %s391
      %394 = dma.vmem_to_hbm [thread:$0]  %s392, 32, %s3, [#allocation4]
    $region25: #{tpu_custom_call.1} parent=1 // pred_fallthru
      _
    // Predicated region
    $region26: #{tpu_custom_call.1} parent=1 // pred_check
      _
    $region27: #{tpu_custom_call.1} parent=1 // pred_check_branch
      %396 = sbr.rel (0) target = $region29
    $region28: #{tpu_custom_call.1} parent=1 // pred_region
      %397 = dma.done [#allocation4], 32
    $region29: #{tpu_custom_call.1} parent=1 // pred_fallthru
      _
    %398 = vsyncpa [#allocation3], 1
    %399 = vsyncpa [#allocation6], 1
    %400 = vsyncpa [#allocation4], 1

</llo_original>
